<compile_context>
chip_gen: v7x
topology: tpu7x:2x2x1
jax: 0.10.0
libtpu: 0.0.40
codegen_flags: <defaults>
</compile_context>

<pallas_src>
import functools

import jax
import jax.numpy as jnp
from jax.experimental import pallas as pl
from jax.experimental.pallas import tpu as pltpu

PAD = 128  # lane-pad every feature dimension to one full vreg lane width


def _round_up(n, m):
    return ((n + m - 1) // m) * m


def _q_mlp_kernel(x_ref, w_ref, b_ref, o_ref):
    """Whole-network MLP on one (TB, 128) batch tile.

    x_ref: (TB, 128)      zero-padded input block
    w_ref: (4, 128, 128)  zero-padded weight slab (layers 1..4, (in, out) layout)
    b_ref: (4, 128)       zero-padded bias slab
    o_ref: (TB, 128)      zero-padded output block (lane-dense, unmasked stores)
    """
    h = jnp.dot(x_ref[...], w_ref[0], preferred_element_type=jnp.float32)
    h = jnp.maximum(h + b_ref[0:1, :], 0.0)            # relu(fc1)

    h = jnp.dot(h, w_ref[1], preferred_element_type=jnp.float32)
    h = jnp.maximum(h + b_ref[1:2, :], 0.0)            # relu(fc2); dropout(p=0) == id

    h = jnp.dot(h, w_ref[2], preferred_element_type=jnp.float32)
    h = jnp.maximum(h + b_ref[2:3, :], 0.0)            # relu(fc3); dropout(p=0) == id

    o_ref[...] = (jnp.dot(h, w_ref[3], preferred_element_type=jnp.float32)
                  + b_ref[3:4, :])                     # fc4 (no activation)


def pack_q_params(params):
    """Pack per-layer (in, out) weights and (1, out) biases into padded slabs.

    Returns (w_slab, b_slab) with shapes (4, 128, 128) and (4, 128); padded
    entries are zero so the padded computation is numerically exact.
    """
    ws, bs = [], []
    for i in range(1, 5):
        w = params[f"w{i}"]
        b = params[f"b{i}"].reshape(-1)
        wp = jnp.zeros((PAD, PAD), jnp.float32).at[:w.shape[0], :w.shape[1]].set(w)
        bp = jnp.zeros((PAD,), jnp.float32).at[:b.shape[0]].set(b)
        ws.append(wp)
        bs.append(bp)
    return jnp.stack(ws), jnp.stack(bs)


@functools.partial(jax.jit, static_argnames=("action_dim",))
def q_forward(x, w_slab, b_slab, action_dim):
    """x: (B, state_dim) f32. w_slab: (4,128,128). b_slab: (4,128)."""
    B, state_dim = x.shape

    # Batch tiling: one block for small batches; 256-row tiles (double-buffered
    # against HBM, weights resident in VMEM, megacore-parallel) for large ones.
    B_pad = _round_up(B, 8)
    if B_pad > 256:
        TB = 256
        B_pad = _round_up(B_pad, TB)
    else:
        TB = B_pad

    # Lane-pad the input so the kernel never touches a <128-wide minor dim.
    x_pad = jnp.zeros((B_pad, PAD), jnp.float32).at[:B, :state_dim].set(x)

    grid = (pl.cdiv(B_pad, TB),)
    out_pad = pl.pallas_call(
        _q_mlp_kernel,
        out_shape=jax.ShapeDtypeStruct((B_pad, PAD), jnp.float32),
        grid=grid,
        in_specs=[
            pl.BlockSpec((TB, PAD), lambda i: (i, 0)),          # x: batch-tiled
            pl.BlockSpec((4, PAD, PAD), lambda i: (0, 0, 0)),   # weights: resident
            pl.BlockSpec((4, PAD), lambda i: (0, 0)),           # biases: resident
        ],
        out_specs=pl.BlockSpec((TB, PAD), lambda i: (i, 0)),
        compiler_params=pltpu.CompilerParams(
            dimension_semantics=("parallel",)),                 # v7x 2nd TC
    )(x_pad, w_slab, b_slab)

    return out_pad[:B, :action_dim]


def init_q_params(key, state_dim, action_dim, hidden_dim=30):
    """Deterministic init mimicking PyTorch nn.Linear default:
    U(-1/sqrt(fan_in), 1/sqrt(fan_in)) for both weight and bias.
    Weights are stored as (in, out) = W_pt.T for the kernel's x @ W layout."""
    dims = [(state_dim, hidden_dim),
            (hidden_dim, hidden_dim),
            (hidden_dim, hidden_dim),
            (hidden_dim, action_dim)]
    params = {}
    for i, (fan_in, fan_out) in enumerate(dims, start=1):
        key, kw, kb = jax.random.split(key, 3)
        bound = 1.0 / (fan_in ** 0.5)
        params[f"w{i}"] = jax.random.uniform(
            kw, (fan_in, fan_out), jnp.float32, minval=-bound, maxval=bound)
        params[f"b{i}"] = jax.random.uniform(
            kb, (1, fan_out), jnp.float32, minval=-bound, maxval=bound)
    return params


def q_forward_ref(x, params):
    """Pure-JAX reference for correctness checking."""
    h = jnp.maximum(x @ params["w1"] + params["b1"], 0.0)
    h = jnp.maximum(h @ params["w2"] + params["b2"], 0.0)
    h = jnp.maximum(h @ params["w3"] + params["b3"], 0.0)
    return h @ params["w4"] + params["b4"]


if __name__ == "__main__":
    key = jax.random.PRNGKey(0)
    kx, kx2, kp = jax.random.split(key, 3)

    state_dim = 6        # e.g. a small continuous-control state
    action_dim = 3
    hidden_dim = 30      # module default

    params = init_q_params(kp, state_dim, action_dim, hidden_dim)
    w_slab, b_slab = pack_q_params(params)

    # Small (action-selection) batch: single-block path.
    x_small = jax.random.normal(kx, (8, state_dim), dtype=jnp.float32)
    out_small = jax.block_until_ready(q_forward(x_small, w_slab, b_slab, action_dim))
    ref_small = q_forward_ref(x_small, params)
    assert out_small.shape == (8, action_dim)
    assert jnp.allclose(out_small, ref_small, atol=1e-5, rtol=1e-5), \
        "small-batch mismatch vs JAX reference"

    # Larger (replay/training) batch: exercises the batch grid + padding path.
    x_big = jax.random.normal(kx2, (300, state_dim), dtype=jnp.float32)
    out_big = jax.block_until_ready(q_forward(x_big, w_slab, b_slab, action_dim))
    ref_big = q_forward_ref(x_big, params)
    assert out_big.shape == (300, action_dim)
    assert jnp.allclose(out_big, ref_big, atol=1e-5, rtol=1e-5), \
        "large-batch mismatch vs JAX reference"

    print("KERNEL_OK")
</pallas_src>

<mosaic_0001>
module attributes {stable_mosaic.version = 11 : i64} {
  func.func @_q_mlp_kernel(%arg0: i32, %arg1: memref<8x128xf32, #tpu.memory_space<vmem>>, %arg2: memref<4x128x128xf32, #tpu.memory_space<vmem>>, %arg3: memref<4x128xf32, #tpu.memory_space<vmem>>, %arg4: memref<8x128xf32, #tpu.memory_space<vmem>>) attributes {dimension_semantics = [#tpu.dimension_semantics<parallel>], iteration_bounds = array<i64: 1>, scalar_prefetch = 0 : i64, scratch_operands = 0 : i64, tpu.core_type = #tpu.core_type<tc>, window_params = [{transform_indices = @transform_0, window_bounds = array<i64: 8, 128>}, {pipeline_mode = #tpu.pipeline_mode<synchronous>, transform_indices = @transform_1, window_bounds = array<i64: 4, 128, 128>}, {pipeline_mode = #tpu.pipeline_mode<synchronous>, transform_indices = @transform_2, window_bounds = array<i64: 4, 128>}, {transform_indices = @transform_3, window_bounds = array<i64: 8, 128>}]} {
    %c0 = arith.constant 0 : index
    %c0_0 = arith.constant 0 : index
    %0 = vector.load %arg1[%c0, %c0_0] : memref<8x128xf32, #tpu.memory_space<vmem>>, vector<8x128xf32>
    %c0_1 = arith.constant 0 : index
    %c0_2 = arith.constant 0 : index
    %c0_3 = arith.constant 0 : index
    %1 = vector.load %arg2[%c0_1, %c0_2, %c0_3] : memref<4x128x128xf32, #tpu.memory_space<vmem>>, vector<1x128x128xf32>
    %2 = vector.shape_cast %1 : vector<1x128x128xf32> to vector<128x128xf32>
    %cst = arith.constant dense<0.000000e+00> : vector<8x128xf32>
    %3 = tpu.matmul %0, %2, %cst {dimension_numbers = #tpu.dot_dimension_numbers<[1], [0], [0], [1], [0, 0, 1, 1], [], []>} : vector<8x128xf32>, vector<128x128xf32>, vector<8x128xf32> -> vector<8x128xf32>
    %c0_4 = arith.constant 0 : index
    %c0_5 = arith.constant 0 : index
    %4 = vector.load %arg3[%c0_4, %c0_5] : memref<4x128xf32, #tpu.memory_space<vmem>>, vector<1x128xf32>
    %5 = vector.broadcast %4 : vector<1x128xf32> to vector<8x128xf32>
    %6 = arith.addf %3, %5 : vector<8x128xf32>
    %cst_6 = arith.constant 0.000000e+00 : f32
    %7 = vector.broadcast %cst_6 : f32 to vector<8x128xf32>
    %8 = arith.maximumf %6, %7 : vector<8x128xf32>
    %c1 = arith.constant 1 : index
    %c0_7 = arith.constant 0 : index
    %c0_8 = arith.constant 0 : index
    %9 = vector.load %arg2[%c1, %c0_7, %c0_8] : memref<4x128x128xf32, #tpu.memory_space<vmem>>, vector<1x128x128xf32>
    %10 = vector.shape_cast %9 : vector<1x128x128xf32> to vector<128x128xf32>
    %cst_9 = arith.constant dense<0.000000e+00> : vector<8x128xf32>
    %11 = tpu.matmul %8, %10, %cst_9 {dimension_numbers = #tpu.dot_dimension_numbers<[1], [0], [0], [1], [0, 0, 1, 1], [], []>} : vector<8x128xf32>, vector<128x128xf32>, vector<8x128xf32> -> vector<8x128xf32>
    %c1_10 = arith.constant 1 : index
    %c0_11 = arith.constant 0 : index
    %12 = vector.load %arg3[%c1_10, %c0_11] : memref<4x128xf32, #tpu.memory_space<vmem>>, vector<1x128xf32>
    %13 = vector.broadcast %12 : vector<1x128xf32> to vector<8x128xf32>
    %14 = arith.addf %11, %13 : vector<8x128xf32>
    %cst_12 = arith.constant 0.000000e+00 : f32
    %15 = vector.broadcast %cst_12 : f32 to vector<8x128xf32>
    %16 = arith.maximumf %14, %15 : vector<8x128xf32>
    %c2 = arith.constant 2 : index
    %c0_13 = arith.constant 0 : index
    %c0_14 = arith.constant 0 : index
    %17 = vector.load %arg2[%c2, %c0_13, %c0_14] : memref<4x128x128xf32, #tpu.memory_space<vmem>>, vector<1x128x128xf32>
    %18 = vector.shape_cast %17 : vector<1x128x128xf32> to vector<128x128xf32>
    %cst_15 = arith.constant dense<0.000000e+00> : vector<8x128xf32>
    %19 = tpu.matmul %16, %18, %cst_15 {dimension_numbers = #tpu.dot_dimension_numbers<[1], [0], [0], [1], [0, 0, 1, 1], [], []>} : vector<8x128xf32>, vector<128x128xf32>, vector<8x128xf32> -> vector<8x128xf32>
    %c2_16 = arith.constant 2 : index
    %c0_17 = arith.constant 0 : index
    %20 = vector.load %arg3[%c2_16, %c0_17] : memref<4x128xf32, #tpu.memory_space<vmem>>, vector<1x128xf32>
    %21 = vector.broadcast %20 : vector<1x128xf32> to vector<8x128xf32>
    %22 = arith.addf %19, %21 : vector<8x128xf32>
    %cst_18 = arith.constant 0.000000e+00 : f32
    %23 = vector.broadcast %cst_18 : f32 to vector<8x128xf32>
    %24 = arith.maximumf %22, %23 : vector<8x128xf32>
    %c3 = arith.constant 3 : index
    %c0_19 = arith.constant 0 : index
    %c0_20 = arith.constant 0 : index
    %25 = vector.load %arg2[%c3, %c0_19, %c0_20] : memref<4x128x128xf32, #tpu.memory_space<vmem>>, vector<1x128x128xf32>
    %26 = vector.shape_cast %25 : vector<1x128x128xf32> to vector<128x128xf32>
    %cst_21 = arith.constant dense<0.000000e+00> : vector<8x128xf32>
    %27 = tpu.matmul %24, %26, %cst_21 {dimension_numbers = #tpu.dot_dimension_numbers<[1], [0], [0], [1], [0, 0, 1, 1], [], []>} : vector<8x128xf32>, vector<128x128xf32>, vector<8x128xf32> -> vector<8x128xf32>
    %c3_22 = arith.constant 3 : index
    %c0_23 = arith.constant 0 : index
    %28 = vector.load %arg3[%c3_22, %c0_23] : memref<4x128xf32, #tpu.memory_space<vmem>>, vector<1x128xf32>
    %29 = vector.broadcast %28 : vector<1x128xf32> to vector<8x128xf32>
    %30 = arith.addf %27, %29 : vector<8x128xf32>
    %c0_24 = arith.constant 0 : index
    %c0_25 = arith.constant 0 : index
    %31 = vector.load %arg4[%c0_24, %c0_25] : memref<8x128xf32, #tpu.memory_space<vmem>>, vector<8x128xf32>
    tpu.vector_store %arg4[%c0_24, %c0_25], %30 {strides = array<i32>} : memref<8x128xf32, #tpu.memory_space<vmem>>, vector<8x128xf32>,
    return
  }
  func.func @transform_0(%arg0: i32) -> (i32, i32) {
    %c0_i32 = arith.constant 0 : i32
    %c0_i32_0 = arith.constant 0 : i32
    return %arg0, %c0_i32 : i32, i32
  }
  func.func @transform_1(%arg0: i32) -> (i32, i32, i32) {
    %c0_i32 = arith.constant 0 : i32
    %c0_i32_0 = arith.constant 0 : i32
    %c0_i32_1 = arith.constant 0 : i32
    %c0_i32_2 = arith.constant 0 : i32
    return %c0_i32, %c0_i32_0, %c0_i32_1 : i32, i32, i32
  }
  func.func @transform_2(%arg0: i32) -> (i32, i32) {
    %c0_i32 = arith.constant 0 : i32
    %c0_i32_0 = arith.constant 0 : i32
    %c0_i32_1 = arith.constant 0 : i32
    return %c0_i32, %c0_i32_0 : i32, i32
  }
  func.func @transform_3(%arg0: i32) -> (i32, i32) {
    %c0_i32 = arith.constant 0 : i32
    %c0_i32_0 = arith.constant 0 : i32
    return %arg0, %c0_i32 : i32, i32
  }
}

</mosaic_0001>

<llo_original>
// kernel: q_forward.1
$region0: #{q_forward.1}
  #allocation0 [shape = 'u32[]', space=smem, size = 0x4, offset = 0x4, fixed_abs, tag = 'smem constant byte address 0x4 - core index']
  #allocation1 [shape = 'u32[144,128]{1,0:T(1,128)}', space=vmem, size = 0x12000, scoped, tag = 'internal scratch']
  %s0 = inlined_call_operand.vmem [shape: f32[8,128], index: 0, kind: input, shape index: {}]
  %s1 = inlined_call_operand.hbm [shape: f32[4,128,128], index: 1, kind: input, shape index: {}]
  %s2 = inlined_call_operand.vmem [shape: f32[4,128], index: 2, kind: input, shape index: {}]
  %s3 = inlined_call_operand.vmem [shape: f32[8,128], index: 3, kind: output, shape index: {}]
  %s4 = sld [smem:[#allocation0]]
  $region26: #{q_forward.1} parent=0
    _
  %s6 = ssub.s32 1, %s4
  %s7 = scalar_select 0, %s6, %s4
  $region1: #{q_forward.1} parent=0
    #allocation2 [shape = 'u8[262144]{0}', space=vmem, size = 0x40000, scoped, tag = 'input window, operand 1, single buffered']
    #allocation3 [shape = 's32[1]{0}', space=sflag, size = 0x4, scoped, tag = 'scoped memory for q_forward.1']
    %8 = vsyncpa [#allocation3], 0
    // Predicated region
    $region2: #{q_forward.1} parent=1 // pred_check
      _
    $region3: #{q_forward.1} parent=1 // pred_check_branch
      %10 = sbr.rel (0) target = $region5
    $region4: #{q_forward.1} parent=1 // pred_region
      _
    $region5: #{q_forward.1} parent=1 // pred_fallthru
      _
    // Predicated region
    $region6: #{q_forward.1} parent=1 // pred_check
      _
    $region7: #{q_forward.1} parent=1 // pred_check_branch
      %12 = sbr.rel (0) target = $region9
    $region8: #{q_forward.1} parent=1 // pred_region
      %s14 = ssub.s32 8192, 8192
      %15 = vsyncadd [#allocation3], %s14
      %s16 = sshll.u32 [#allocation2], 4
      %s17 = int_to_ptr.vmem [resolvable:$true] %s16
      %22 = dma.hbm_to_vmem [thread:$0]  %s1, 8192, %s17, [#allocation3], 128, 128, 8
    $region9: #{q_forward.1} parent=1 // pred_fallthru
      _
    // Predicated region
    $region10: #{q_forward.1} parent=1 // pred_check
      _
    $region11: #{q_forward.1} parent=1 // pred_check_branch
      %24 = sbr.rel (0) target = $region13
    $region12: #{q_forward.1} parent=1 // pred_region
      _
    $region13: #{q_forward.1} parent=1 // pred_fallthru
      _
    // Predicated region
    $region14: #{q_forward.1} parent=1 // pred_check
      _
    $region15: #{q_forward.1} parent=1 // pred_check_branch
      %26 = sbr.rel (0) target = $region17
    $region16: #{q_forward.1} parent=1 // pred_region
      %27 = dma.done [#allocation3], 8192
    $region17: #{q_forward.1} parent=1 // pred_fallthru
      _
    %v28 = vld [vmem:[%s0] sm:$0xff]
    %v29 = vld [vmem:[#allocation2] sm:$0xff]
    %v30 = vld [vmem:[#allocation2 + $0x8] sm:$0xff]
    %v31 = vld [vmem:[#allocation2 + $0x10] sm:$0xff]
    %v32 = vld [vmem:[#allocation2 + $0x18] sm:$0xff]
    %v33 = vld [vmem:[#allocation2 + $0x20] sm:$0xff]
    %v34 = vld [vmem:[#allocation2 + $0x28] sm:$0xff]
    %v35 = vld [vmem:[#allocation2 + $0x30] sm:$0xff]
    %v36 = vld [vmem:[#allocation2 + $0x38] sm:$0xff]
    %v37 = vld [vmem:[#allocation2 + $0x40] sm:$0xff]
    %v38 = vld [vmem:[#allocation2 + $0x48] sm:$0xff]
    %v39 = vld [vmem:[#allocation2 + $0x50] sm:$0xff]
    %v40 = vld [vmem:[#allocation2 + $0x58] sm:$0xff]
    %v41 = vld [vmem:[#allocation2 + $0x60] sm:$0xff]
    %v42 = vld [vmem:[#allocation2 + $0x68] sm:$0xff]
    %v43 = vld [vmem:[#allocation2 + $0x70] sm:$0xff]
    %v44 = vld [vmem:[#allocation2 + $0x78] sm:$0xff]
    %v45 = vld [vmem:[%s2] sm:$0x1]
    %v46 = vlaneseq
    %v47 = vshrl.u32 %v46, 7
    %v48 = vsub.s32 0, %v47
    %v49 = vrot.slane %v45, %v48
    %50 = vmatprep.subr.mxu0 0.0
    %51 = vmatpush1.msra.mxu0 %v29
    %52 = vmatprep.subr.mxu0 0.0
    %53 = vmatpush1.msra.mxu0 %v30
    %54 = vmatprep.subr.mxu0 0.0
    %55 = vmatpush1.msra.mxu0 %v31
    %56 = vmatprep.subr.mxu0 0.0
    %57 = vmatpush1.msra.mxu0 %v32
    %58 = vmatprep.subr.mxu0 0.0
    %59 = vmatpush1.msra.mxu0 %v33
    %60 = vmatprep.subr.mxu0 0.0
    %61 = vmatpush1.msra.mxu0 %v34
    %62 = vmatprep.subr.mxu0 0.0
    %63 = vmatpush1.msra.mxu0 %v35
    %64 = vmatprep.subr.mxu0 0.0
    %65 = vmatpush1.msra.mxu0 %v36
    %66 = vmatprep.subr.mxu0 0.0
    %67 = vmatpush1.msra.mxu0 %v37
    %68 = vmatprep.subr.mxu0 0.0
    %69 = vmatpush1.msra.mxu0 %v38
    %70 = vmatprep.subr.mxu0 0.0
    %71 = vmatpush1.msra.mxu0 %v39
    %72 = vmatprep.subr.mxu0 0.0
    %73 = vmatpush1.msra.mxu0 %v40
    %74 = vmatprep.subr.mxu0 0.0
    %75 = vmatpush1.msra.mxu0 %v41
    %76 = vmatprep.subr.mxu0 0.0
    %77 = vmatpush1.msra.mxu0 %v42
    %78 = vmatprep.subr.mxu0 0.0
    %79 = vmatpush1.msra.mxu0 %v43
    %80 = vmatprep.subr.mxu0 0.0
    %81 = vmatpush1.msra.mxu0 %v44
    %82 = vmatprep.subr.mxu0 0.0
    %83 = vmatpush1.msra.mxu0 0.0
    %84 = vmatprep.subr.mxu0 0.0
    %85 = vmatpush1.msra.mxu0 0.0
    %86 = vmatprep.subr.mxu0 0.0
    %87 = vmatpush1.msra.mxu0 0.0
    %88 = vmatprep.subr.mxu0 0.0
    %89 = vmatpush1.msra.mxu0 0.0
    %90 = vmatprep.subr.mxu0 0.0
    %91 = vmatpush1.msra.mxu0 0.0
    %92 = vmatprep.subr.mxu0 0.0
    %93 = vmatpush1.msra.mxu0 0.0
    %94 = vmatprep.subr.mxu0 0.0
    %95 = vmatpush1.msra.mxu0 0.0
    %96 = vmatprep.subr.mxu0 0.0
    %97 = vmatpush1.msra.mxu0 0.0
    %98 = vmatprep.subr.mxu0 0.0
    %99 = vmatpush1.msra.mxu0 0.0
    %100 = vmatprep.subr.mxu0 0.0
    %101 = vmatpush1.msra.mxu0 0.0
    %102 = vmatprep.subr.mxu0 0.0
    %103 = vmatpush1.msra.mxu0 0.0
    %104 = vmatprep.subr.mxu0 0.0
    %105 = vmatpush1.msra.mxu0 0.0
    %106 = vmatprep.subr.mxu0 0.0
    %107 = vmatpush1.msra.mxu0 0.0
    %108 = vmatprep.subr.mxu0 0.0
    %109 = vmatpush1.msra.mxu0 0.0
    %110 = vmatprep.subr.mxu0 0.0
    %111 = vmatpush1.msra.mxu0 0.0
    %112 = vmatprep.subr.mxu0 0.0
    %113 = vmatpush1.msra.mxu0 0.0
    %114 = vmatprep.mubr.f32.mxu0 0.0
    %115 = vmatmul.mubr.f32.gmra.mrb[0].mxu0 %v28
    %v116 = vpop.f32.mrb[0].mxu0
    %v117 = vadd.f32 %v49, %v116
    %v118 = vpop.f32.mrb[0].mxu0
    %119 = vdwg.mxu0
    %v120 = vmax.f32 %v117, 0.0
    %s121 = scalar_lea.vmem [#allocation2], 128
    %v122 = vld [vmem:[%s121] sm:$0xff]
    %v123 = vld [vmem:[%s121 + $0x8] sm:$0xff]
    %v124 = vld [vmem:[%s121 + $0x10] sm:$0xff]
    %v125 = vld [vmem:[%s121 + $0x18] sm:$0xff]
    %v126 = vld [vmem:[%s121 + $0x20] sm:$0xff]
    %v127 = vld [vmem:[%s121 + $0x28] sm:$0xff]
    %v128 = vld [vmem:[%s121 + $0x30] sm:$0xff]
    %v129 = vld [vmem:[%s121 + $0x38] sm:$0xff]
    %v130 = vld [vmem:[%s121 + $0x40] sm:$0xff]
    %v131 = vld [vmem:[%s121 + $0x48] sm:$0xff]
    %v132 = vld [vmem:[%s121 + $0x50] sm:$0xff]
    %v133 = vld [vmem:[%s121 + $0x58] sm:$0xff]
    %v134 = vld [vmem:[%s121 + $0x60] sm:$0xff]
    %v135 = vld [vmem:[%s121 + $0x68] sm:$0xff]
    %v136 = vld [vmem:[%s121 + $0x70] sm:$0xff]
    %v137 = vld [vmem:[%s121 + $0x78] sm:$0xff]
    %v138 = vld [vmem:[%s2 + $0x1] sm:$0x1]
    %v139 = vlaneseq
    %v140 = vshrl.u32 %v139, 7
    %v141 = vsub.s32 0, %v140
    %v142 = vrot.slane %v138, %v141
    %143 = vmatprep.subr.mxu0 0.0
    %144 = vmatpush1.msra.mxu0 %v122
    %145 = vmatprep.subr.mxu0 0.0
    %146 = vmatpush1.msra.mxu0 %v123
    %147 = vmatprep.subr.mxu0 0.0
    %148 = vmatpush1.msra.mxu0 %v124
    %149 = vmatprep.subr.mxu0 0.0
    %150 = vmatpush1.msra.mxu0 %v125
    %151 = vmatprep.subr.mxu0 0.0
    %152 = vmatpush1.msra.mxu0 %v126
    %153 = vmatprep.subr.mxu0 0.0
    %154 = vmatpush1.msra.mxu0 %v127
    %155 = vmatprep.subr.mxu0 0.0
    %156 = vmatpush1.msra.mxu0 %v128
    %157 = vmatprep.subr.mxu0 0.0
    %158 = vmatpush1.msra.mxu0 %v129
    %159 = vmatprep.subr.mxu0 0.0
    %160 = vmatpush1.msra.mxu0 %v130
    %161 = vmatprep.subr.mxu0 0.0
    %162 = vmatpush1.msra.mxu0 %v131
    %163 = vmatprep.subr.mxu0 0.0
    %164 = vmatpush1.msra.mxu0 %v132
    %165 = vmatprep.subr.mxu0 0.0
    %166 = vmatpush1.msra.mxu0 %v133
    %167 = vmatprep.subr.mxu0 0.0
    %168 = vmatpush1.msra.mxu0 %v134
    %169 = vmatprep.subr.mxu0 0.0
    %170 = vmatpush1.msra.mxu0 %v135
    %171 = vmatprep.subr.mxu0 0.0
    %172 = vmatpush1.msra.mxu0 %v136
    %173 = vmatprep.subr.mxu0 0.0
    %174 = vmatpush1.msra.mxu0 %v137
    %175 = vmatprep.subr.mxu0 0.0
    %176 = vmatpush1.msra.mxu0 0.0
    %177 = vmatprep.subr.mxu0 0.0
    %178 = vmatpush1.msra.mxu0 0.0
    %179 = vmatprep.subr.mxu0 0.0
    %180 = vmatpush1.msra.mxu0 0.0
    %181 = vmatprep.subr.mxu0 0.0
    %182 = vmatpush1.msra.mxu0 0.0
    %183 = vmatprep.subr.mxu0 0.0
    %184 = vmatpush1.msra.mxu0 0.0
    %185 = vmatprep.subr.mxu0 0.0
    %186 = vmatpush1.msra.mxu0 0.0
    %187 = vmatprep.subr.mxu0 0.0
    %188 = vmatpush1.msra.mxu0 0.0
    %189 = vmatprep.subr.mxu0 0.0
    %190 = vmatpush1.msra.mxu0 0.0
    %191 = vmatprep.subr.mxu0 0.0
    %192 = vmatpush1.msra.mxu0 0.0
    %193 = vmatprep.subr.mxu0 0.0
    %194 = vmatpush1.msra.mxu0 0.0
    %195 = vmatprep.subr.mxu0 0.0
    %196 = vmatpush1.msra.mxu0 0.0
    %197 = vmatprep.subr.mxu0 0.0
    %198 = vmatpush1.msra.mxu0 0.0
    %199 = vmatprep.subr.mxu0 0.0
    %200 = vmatpush1.msra.mxu0 0.0
    %201 = vmatprep.subr.mxu0 0.0
    %202 = vmatpush1.msra.mxu0 0.0
    %203 = vmatprep.subr.mxu0 0.0
    %204 = vmatpush1.msra.mxu0 0.0
    %205 = vmatprep.subr.mxu0 0.0
    %206 = vmatpush1.msra.mxu0 0.0
    %207 = vmatprep.mubr.f32.mxu0 0.0
    %208 = vmatmul.mubr.f32.gmra.mrb[0].mxu0 %v120
    %v209 = vpop.f32.mrb[0].mxu0
    %v210 = vadd.f32 %v142, %v209
    %v211 = vpop.f32.mrb[0].mxu0
    %212 = vdwg.mxu0
    %v213 = vmax.f32 %v210, 0.0
    %s214 = scalar_lea.vmem [#allocation2], 256
    %v215 = vld [vmem:[%s214] sm:$0xff]
    %v216 = vld [vmem:[%s214 + $0x8] sm:$0xff]
    %v217 = vld [vmem:[%s214 + $0x10] sm:$0xff]
    %v218 = vld [vmem:[%s214 + $0x18] sm:$0xff]
    %v219 = vld [vmem:[%s214 + $0x20] sm:$0xff]
    %v220 = vld [vmem:[%s214 + $0x28] sm:$0xff]
    %v221 = vld [vmem:[%s214 + $0x30] sm:$0xff]
    %v222 = vld [vmem:[%s214 + $0x38] sm:$0xff]
    %v223 = vld [vmem:[%s214 + $0x40] sm:$0xff]
    %v224 = vld [vmem:[%s214 + $0x48] sm:$0xff]
    %v225 = vld [vmem:[%s214 + $0x50] sm:$0xff]
    %v226 = vld [vmem:[%s214 + $0x58] sm:$0xff]
    %v227 = vld [vmem:[%s214 + $0x60] sm:$0xff]
    %v228 = vld [vmem:[%s214 + $0x68] sm:$0xff]
    %v229 = vld [vmem:[%s214 + $0x70] sm:$0xff]
    %v230 = vld [vmem:[%s214 + $0x78] sm:$0xff]
    %v231 = vld [vmem:[%s2 + $0x2] sm:$0x1]
    %v232 = vlaneseq
    %v233 = vshrl.u32 %v232, 7
    %v234 = vsub.s32 0, %v233
    %v235 = vrot.slane %v231, %v234
    %236 = vmatprep.subr.mxu0 0.0
    %237 = vmatpush1.msra.mxu0 %v215
    %238 = vmatprep.subr.mxu0 0.0
    %239 = vmatpush1.msra.mxu0 %v216
    %240 = vmatprep.subr.mxu0 0.0
    %241 = vmatpush1.msra.mxu0 %v217
    %242 = vmatprep.subr.mxu0 0.0
    %243 = vmatpush1.msra.mxu0 %v218
    %244 = vmatprep.subr.mxu0 0.0
    %245 = vmatpush1.msra.mxu0 %v219
    %246 = vmatprep.subr.mxu0 0.0
    %247 = vmatpush1.msra.mxu0 %v220
    %248 = vmatprep.subr.mxu0 0.0
    %249 = vmatpush1.msra.mxu0 %v221
    %250 = vmatprep.subr.mxu0 0.0
    %251 = vmatpush1.msra.mxu0 %v222
    %252 = vmatprep.subr.mxu0 0.0
    %253 = vmatpush1.msra.mxu0 %v223
    %254 = vmatprep.subr.mxu0 0.0
    %255 = vmatpush1.msra.mxu0 %v224
    %256 = vmatprep.subr.mxu0 0.0
    %257 = vmatpush1.msra.mxu0 %v225
    %258 = vmatprep.subr.mxu0 0.0
    %259 = vmatpush1.msra.mxu0 %v226
    %260 = vmatprep.subr.mxu0 0.0
    %261 = vmatpush1.msra.mxu0 %v227
    %262 = vmatprep.subr.mxu0 0.0
    %263 = vmatpush1.msra.mxu0 %v228
    %264 = vmatprep.subr.mxu0 0.0
    %265 = vmatpush1.msra.mxu0 %v229
    %266 = vmatprep.subr.mxu0 0.0
    %267 = vmatpush1.msra.mxu0 %v230
    %268 = vmatprep.subr.mxu0 0.0
    %269 = vmatpush1.msra.mxu0 0.0
    %270 = vmatprep.subr.mxu0 0.0
    %271 = vmatpush1.msra.mxu0 0.0
    %272 = vmatprep.subr.mxu0 0.0
    %273 = vmatpush1.msra.mxu0 0.0
    %274 = vmatprep.subr.mxu0 0.0
    %275 = vmatpush1.msra.mxu0 0.0
    %276 = vmatprep.subr.mxu0 0.0
    %277 = vmatpush1.msra.mxu0 0.0
    %278 = vmatprep.subr.mxu0 0.0
    %279 = vmatpush1.msra.mxu0 0.0
    %280 = vmatprep.subr.mxu0 0.0
    %281 = vmatpush1.msra.mxu0 0.0
    %282 = vmatprep.subr.mxu0 0.0
    %283 = vmatpush1.msra.mxu0 0.0
    %284 = vmatprep.subr.mxu0 0.0
    %285 = vmatpush1.msra.mxu0 0.0
    %286 = vmatprep.subr.mxu0 0.0
    %287 = vmatpush1.msra.mxu0 0.0
    %288 = vmatprep.subr.mxu0 0.0
    %289 = vmatpush1.msra.mxu0 0.0
    %290 = vmatprep.subr.mxu0 0.0
    %291 = vmatpush1.msra.mxu0 0.0
    %292 = vmatprep.subr.mxu0 0.0
    %293 = vmatpush1.msra.mxu0 0.0
    %294 = vmatprep.subr.mxu0 0.0
    %295 = vmatpush1.msra.mxu0 0.0
    %296 = vmatprep.subr.mxu0 0.0
    %297 = vmatpush1.msra.mxu0 0.0
    %298 = vmatprep.subr.mxu0 0.0
    %299 = vmatpush1.msra.mxu0 0.0
    %300 = vmatprep.mubr.f32.mxu0 0.0
    %301 = vmatmul.mubr.f32.gmra.mrb[0].mxu0 %v213
    %v302 = vpop.f32.mrb[0].mxu0
    %v303 = vadd.f32 %v235, %v302
    %v304 = vpop.f32.mrb[0].mxu0
    %305 = vdwg.mxu0
    %v306 = vmax.f32 %v303, 0.0
    %s307 = scalar_lea.vmem [#allocation2], 384
    %v308 = vld [vmem:[%s307] sm:$0xff]
    %v309 = vld [vmem:[%s307 + $0x8] sm:$0xff]
    %v310 = vld [vmem:[%s307 + $0x10] sm:$0xff]
    %v311 = vld [vmem:[%s307 + $0x18] sm:$0xff]
    %v312 = vld [vmem:[%s307 + $0x20] sm:$0xff]
    %v313 = vld [vmem:[%s307 + $0x28] sm:$0xff]
    %v314 = vld [vmem:[%s307 + $0x30] sm:$0xff]
    %v315 = vld [vmem:[%s307 + $0x38] sm:$0xff]
    %v316 = vld [vmem:[%s307 + $0x40] sm:$0xff]
    %v317 = vld [vmem:[%s307 + $0x48] sm:$0xff]
    %v318 = vld [vmem:[%s307 + $0x50] sm:$0xff]
    %v319 = vld [vmem:[%s307 + $0x58] sm:$0xff]
    %v320 = vld [vmem:[%s307 + $0x60] sm:$0xff]
    %v321 = vld [vmem:[%s307 + $0x68] sm:$0xff]
    %v322 = vld [vmem:[%s307 + $0x70] sm:$0xff]
    %v323 = vld [vmem:[%s307 + $0x78] sm:$0xff]
    %v324 = vld [vmem:[%s2 + $0x3] sm:$0x1]
    %v325 = vlaneseq
    %v326 = vshrl.u32 %v325, 7
    %v327 = vsub.s32 0, %v326
    %v328 = vrot.slane %v324, %v327
    %329 = vmatprep.subr.mxu0 0.0
    %330 = vmatpush1.msra.mxu0 %v308
    %331 = vmatprep.subr.mxu0 0.0
    %332 = vmatpush1.msra.mxu0 %v309
    %333 = vmatprep.subr.mxu0 0.0
    %334 = vmatpush1.msra.mxu0 %v310
    %335 = vmatprep.subr.mxu0 0.0
    %336 = vmatpush1.msra.mxu0 %v311
    %337 = vmatprep.subr.mxu0 0.0
    %338 = vmatpush1.msra.mxu0 %v312
    %339 = vmatprep.subr.mxu0 0.0
    %340 = vmatpush1.msra.mxu0 %v313
    %341 = vmatprep.subr.mxu0 0.0
    %342 = vmatpush1.msra.mxu0 %v314
    %343 = vmatprep.subr.mxu0 0.0
    %344 = vmatpush1.msra.mxu0 %v315
    %345 = vmatprep.subr.mxu0 0.0
    %346 = vmatpush1.msra.mxu0 %v316
    %347 = vmatprep.subr.mxu0 0.0
    %348 = vmatpush1.msra.mxu0 %v317
    %349 = vmatprep.subr.mxu0 0.0
    %350 = vmatpush1.msra.mxu0 %v318
    %351 = vmatprep.subr.mxu0 0.0
    %352 = vmatpush1.msra.mxu0 %v319
    %353 = vmatprep.subr.mxu0 0.0
    %354 = vmatpush1.msra.mxu0 %v320
    %355 = vmatprep.subr.mxu0 0.0
    %356 = vmatpush1.msra.mxu0 %v321
    %357 = vmatprep.subr.mxu0 0.0
    %358 = vmatpush1.msra.mxu0 %v322
    %359 = vmatprep.subr.mxu0 0.0
    %360 = vmatpush1.msra.mxu0 %v323
    %361 = vmatprep.subr.mxu0 0.0
    %362 = vmatpush1.msra.mxu0 0.0
    %363 = vmatprep.subr.mxu0 0.0
    %364 = vmatpush1.msra.mxu0 0.0
    %365 = vmatprep.subr.mxu0 0.0
    %366 = vmatpush1.msra.mxu0 0.0
    %367 = vmatprep.subr.mxu0 0.0
    %368 = vmatpush1.msra.mxu0 0.0
    %369 = vmatprep.subr.mxu0 0.0
    %370 = vmatpush1.msra.mxu0 0.0
    %371 = vmatprep.subr.mxu0 0.0
    %372 = vmatpush1.msra.mxu0 0.0
    %373 = vmatprep.subr.mxu0 0.0
    %374 = vmatpush1.msra.mxu0 0.0
    %375 = vmatprep.subr.mxu0 0.0
    %376 = vmatpush1.msra.mxu0 0.0
    %377 = vmatprep.subr.mxu0 0.0
    %378 = vmatpush1.msra.mxu0 0.0
    %379 = vmatprep.subr.mxu0 0.0
    %380 = vmatpush1.msra.mxu0 0.0
    %381 = vmatprep.subr.mxu0 0.0
    %382 = vmatpush1.msra.mxu0 0.0
    %383 = vmatprep.subr.mxu0 0.0
    %384 = vmatpush1.msra.mxu0 0.0
    %385 = vmatprep.subr.mxu0 0.0
    %386 = vmatpush1.msra.mxu0 0.0
    %387 = vmatprep.subr.mxu0 0.0
    %388 = vmatpush1.msra.mxu0 0.0
    %389 = vmatprep.subr.mxu0 0.0
    %390 = vmatpush1.msra.mxu0 0.0
    %391 = vmatprep.subr.mxu0 0.0
    %392 = vmatpush1.msra.mxu0 0.0
    %393 = vmatprep.mubr.f32.mxu0 0.0
    %394 = vmatmul.mubr.f32.gmra.mrb[0].mxu0 %v306
    %v395 = vpop.f32.mrb[0].mxu0
    %v396 = vadd.f32 %v328, %v395
    %v397 = vpop.f32.mrb[0].mxu0
    %398 = vdwg.mxu0
    %399 = vst [vmem:[%s3] sm:$0xff] %v396
    // Predicated region
    $region18: #{q_forward.1} parent=1 // pred_check
      _
    $region19: #{q_forward.1} parent=1 // pred_check_branch
      %401 = sbr.rel (0) target = $region21
    $region20: #{q_forward.1} parent=1 // pred_region
      _
    $region21: #{q_forward.1} parent=1 // pred_fallthru
      _
    // Predicated region
    $region22: #{q_forward.1} parent=1 // pred_check
      _
    $region23: #{q_forward.1} parent=1 // pred_check_branch
      %403 = sbr.rel (0) target = $region25
    $region24: #{q_forward.1} parent=1 // pred_region
      _
    $region25: #{q_forward.1} parent=1 // pred_fallthru
      _
    %404 = vsyncpa [#allocation3], 1

</llo_original>
